<compile_context>
chip_gen: v7x
topology: tpu7x:2x2x1
jax: 0.10.0
libtpu: 0.0.40
codegen_flags: <defaults>
</compile_context>

<pallas_src>
import jax
import jax.numpy as jnp
from jax.experimental import pallas as pl
from jax.experimental.pallas import tpu as pltpu


def _convt1x1_sigmoid_kernel(x_ref, w_ref, b_ref, o_ref):
    # x_ref: (B_T, C, T) VMEM   w_ref: (C, 1) VMEM   b_ref: (1,) SMEM   o_ref: (B_T, T) VMEM
    x = x_ref[...]                                      # (B_T, C, T)
    w = w_ref[...]                                      # (C, 1)
    # VPU broadcast-multiply + XLU sublane reduce over the 16 channels.
    y = jnp.sum(x * w[None, :, :], axis=1)              # (B_T, T)
    o_ref[...] = jax.nn.sigmoid(y + b_ref[0]).astype(o_ref.dtype)


def _round_up(x, m):
    return ((x + m - 1) // m) * m


_TARGET_BLOCK_BYTES = 2 * 1024 * 1024   # ~2 MiB input block (x2 buffering -> ~4 MiB)
_MAX_T = 32768                          # lane-tile cap


def _choose_tiles(N, C, HW, itemsize=4):
    """Pick (B_T, T): batch tile and lane-dense spatial tile."""
    T_full = _round_up(HW, 128)

    # Batch tile must be == N or a multiple of 8 (output block (B_T, T) constraint).
    B_T = N if N <= 8 else 8

    # Spatial tile: aim for ~_TARGET_BLOCK_BYTES of input per grid step.
    t_ideal = max(128, (_TARGET_BLOCK_BYTES // (B_T * C * itemsize) // 128) * 128)
    T = min(T_full, _MAX_T, t_ideal)

    # If the spatial tile already covers all of HW and the batch is large,
    # grow the batch tile instead (big-N / small-HW shapes).
    if T >= T_full and N > 8:
        T = T_full
        bt_ideal = _TARGET_BLOCK_BYTES // (C * T * itemsize)
        B_T = max(8, (bt_ideal // 8) * 8)
        if B_T >= N:
            B_T = N

    # Guarantee >= 2 grid steps when splittable so both v7x TensorCores get work.
    def steps(bt, t):
        return pl.cdiv(N, bt) * pl.cdiv(HW, t)

    while steps(B_T, T) < 2:
        if T > 128:
            T = max(128, ((T // 2) // 128) * 128)
        elif N > 8 and B_T > 8:
            B_T = max(8, ((B_T // 2) // 8) * 8)
        else:
            break
    return B_T, T


def convt1x1_sigmoid(x_nchw, weight, bias):
    """x_nchw: (N, C_in, H, W) f32.  weight: (C_in, 1, 1, 1).  bias: (1,)."""
    N, C, H, W = x_nchw.shape
    assert weight.shape == (C, 1, 1, 1)
    HW = H * W

    # Free (contiguous) reshapes only -- no HBM transpose pass.
    x3 = x_nchw.reshape(N, C, HW)       # (N, C, HW): channels on sublanes, spatial on lanes
    w_col = weight.reshape(C, 1)        # (C, 1)
    b_vec = bias.reshape(1)             # (1,)

    B_T, T = _choose_tiles(N, C, HW, itemsize=x3.dtype.itemsize)
    grid = (pl.cdiv(N, B_T), pl.cdiv(HW, T))   # partial tiles handled by Pallas masking

    out2 = pl.pallas_call(
        _convt1x1_sigmoid_kernel,
        out_shape=jax.ShapeDtypeStruct((N, HW), jnp.float32),
        grid=grid,
        in_specs=[
            pl.BlockSpec((B_T, C, T), lambda n, t: (n, 0, t)),            # x tile
            pl.BlockSpec((C, 1), lambda n, t: (0, 0)),                    # weight column (constant block)
            pl.BlockSpec(memory_space=pltpu.MemorySpace.SMEM),            # bias scalar
        ],
        out_specs=pl.BlockSpec((B_T, T), lambda n, t: (n, t)),            # multi-sublane, lane-dense output
        compiler_params=pltpu.CompilerParams(
            dimension_semantics=("parallel", "parallel"),
        ),
        cost_estimate=pl.CostEstimate(
            flops=2 * N * C * HW,
            transcendentals=N * HW,
            bytes_accessed=N * C * HW * 4 + N * HW * 4 + C * 4 + 4,
        ),
    )(x3, w_col, b_vec)

    return out2.reshape(N, 1, H, W)


if __name__ == "__main__":
    key = jax.random.PRNGKey(0)
    kx, kw, kb = jax.random.split(key, 3)

    # Small shapes consistent with the module: C_in must be 16.
    N, C, H, W = 2, 16, 16, 16
    x = jax.random.normal(kx, (N, C, H, W), dtype=jnp.float32)

    # ConvTranspose2d weight shape: (C_in, C_out, kH, kW) = (16, 1, 1, 1).
    weight = jax.random.normal(kw, (C, 1, 1, 1), dtype=jnp.float32) * 0.1
    bias = jax.random.normal(kb, (1,), dtype=jnp.float32) * 0.1

    out = convt1x1_sigmoid(x, weight, bias)
    out = jax.block_until_ready(out)

    # Pure-JAX reference check.
    ref = jax.nn.sigmoid(
        jnp.einsum("nchw,co->nohw", x, weight.reshape(C, 1)) + bias.reshape(1, 1, 1, 1)
    )
    assert out.shape == (N, 1, H, W)
    assert jnp.allclose(out, ref, atol=1e-5, rtol=1e-5)

    print("KERNEL_OK")
</pallas_src>

<mosaic_0001>
module attributes {stable_mosaic.version = 11 : i64} {
  func.func @_convt1x1_sigmoid_kernel(%arg0: i32, %arg1: i32, %arg2: memref<2x16x128xf32, #tpu.memory_space<vmem>>, %arg3: memref<16x1xf32, #tpu.memory_space<vmem>>, %arg4: memref<1xf32, #tpu.memory_space<smem>>, %arg5: memref<2x128xf32, #tpu.memory_space<vmem>>) attributes {dimension_semantics = [#tpu.dimension_semantics<parallel>, #tpu.dimension_semantics<parallel>], iteration_bounds = array<i64: 1, 2>, scalar_prefetch = 0 : i64, scratch_operands = 0 : i64, tpu.core_type = #tpu.core_type<tc>, window_params = [{transform_indices = @transform_0, window_bounds = array<i64: 2, 16, 128>}, {pipeline_mode = #tpu.pipeline_mode<synchronous>, transform_indices = @transform_1, window_bounds = array<i64: 16, 1>}, {transform_indices = @transform_2, window_bounds = array<i64: 1>}, {transform_indices = @transform_3, window_bounds = array<i64: 2, 128>}]} {
    %c0 = arith.constant 0 : index
    %c0_0 = arith.constant 0 : index
    %c0_1 = arith.constant 0 : index
    %0 = vector.load %arg2[%c0, %c0_0, %c0_1] : memref<2x16x128xf32, #tpu.memory_space<vmem>>, vector<2x16x128xf32>
    %c0_2 = arith.constant 0 : index
    %c0_3 = arith.constant 0 : index
    %1 = vector.load %arg3[%c0_2, %c0_3] : memref<16x1xf32, #tpu.memory_space<vmem>>, vector<16x1xf32>
    %2 = vector.shape_cast %1 : vector<16x1xf32> to vector<1x16x1xf32>
    %3 = vector.broadcast %2 : vector<1x16x1xf32> to vector<2x16x128xf32>
    %4 = arith.mulf %0, %3 : vector<2x16x128xf32>
    %cst = arith.constant dense<0.000000e+00> : vector<2x128xf32>
    %5 = vector.multi_reduction <add>, %4, %cst [1] : vector<2x16x128xf32> to vector<2x128xf32>
    %c0_4 = arith.constant 0 : index
    %6 = memref.load %arg4[%c0_4] : memref<1xf32, #tpu.memory_space<smem>>
    %7 = vector.broadcast %6 : f32 to vector<2x128xf32>
    %8 = arith.addf %5, %7 : vector<2x128xf32>
    %9 = arith.negf %8 : vector<2x128xf32>
    %10 = math.exp %9 : vector<2x128xf32>
    %cst_5 = arith.constant 1.000000e+00 : f32
    %11 = vector.broadcast %cst_5 : f32 to vector<2x128xf32>
    %12 = arith.addf %11, %10 : vector<2x128xf32>
    %13 = arith.divf %11, %12 : vector<2x128xf32>
    %c0_6 = arith.constant 0 : index
    %c0_7 = arith.constant 0 : index
    %14 = vector.load %arg5[%c0_6, %c0_7] : memref<2x128xf32, #tpu.memory_space<vmem>>, vector<2x128xf32>
    tpu.vector_store %arg5[%c0_6, %c0_7], %13 {strides = array<i32>} : memref<2x128xf32, #tpu.memory_space<vmem>>, vector<2x128xf32>,
    return
  }
  func.func @transform_0(%arg0: i32, %arg1: i32) -> (i32, i32, i32) {
    %c0_i32 = arith.constant 0 : i32
    %c0_i32_0 = arith.constant 0 : i32
    return %arg0, %c0_i32, %arg1 : i32, i32, i32
  }
  func.func @transform_1(%arg0: i32, %arg1: i32) -> (i32, i32) {
    %c0_i32 = arith.constant 0 : i32
    %c0_i32_0 = arith.constant 0 : i32
    %c0_i32_1 = arith.constant 0 : i32
    return %c0_i32, %c0_i32_0 : i32, i32
  }
  func.func @transform_2(%arg0: i32, %arg1: i32) -> i32 {
    %c0_i32 = arith.constant 0 : i32
    %c0_i32_0 = arith.constant 0 : i32
    return %c0_i32 : i32
  }
  func.func @transform_3(%arg0: i32, %arg1: i32) -> (i32, i32) {
    %c0_i32 = arith.constant 0 : i32
    return %arg0, %arg1 : i32, i32
  }
}

</mosaic_0001>

<llo_original>
// kernel: tpu_custom_call.1
$region0: #{tpu_custom_call.1}
  #allocation0 [shape = 'u32[]', space=smem, size = 0x4, offset = 0x4, fixed_abs, tag = 'smem constant byte address 0x4 - core index']
  #allocation1 [shape = 'u32[144,128]{1,0:T(1,128)}', space=vmem, size = 0x12000, scoped, tag = 'internal scratch']
  #allocation2 [shape = 'f32[1]{0:T(128)S(6)}', space=smem, size = 0x200, scoped, tag = 'scoped memory for tpu_custom_call.1']
  %s0 = inlined_call_operand.hbm [shape: f32[2,16,256], index: 0, kind: input, shape index: {}]
  %s1 = inlined_call_operand.vmem [shape: f32[16,1], index: 1, kind: input, shape index: {}]
  %s2 = inlined_call_operand.<no memory space> [shape: f32[1], index: 2, kind: input, shape index: {}]
  %s3 = inlined_call_operand.hbm [shape: f32[2,256], index: 3, kind: output, shape index: {}]
  %s4 = sld [smem:[#allocation0]]
  $region49: #{tpu_custom_call.1} parent=0
    _
  %s6 = ssub.s32 1, %s4
  %s7 = scalar_select 0, %s6, %s4
  %8 = sst [smem:[#allocation2]] %s2
  $region1: #{tpu_custom_call.1} parent=0
    #allocation3 [shape = 'u8[32768]{0}', space=vmem, size = 0x8000, scoped, tag = 'input window, operand 0']
    #allocation4 [shape = 's32[2]{0}', space=sflag, size = 0x8, scoped, tag = 'scoped memory for tpu_custom_call.1']
    #allocation5 [shape = 's32[2]{0}', space=sflag, size = 0x8, scoped, tag = 'scoped memory for tpu_custom_call.1']
    #allocation6 [shape = 'u8[2048]{0}', space=vmem, size = 0x800, scoped, tag = 'output window, operand 0']
    %9 = vsyncpa [#allocation4], 0
    %s10 = scalar_lea.sflag [#allocation4], 1
    %11 = vsyncpa %s10, 0
    %12 = vsyncpa [#allocation5], 0
    %s13 = scalar_lea.sflag [#allocation5], 1
    %14 = vsyncpa %s13, 0
    loop: start=0, step=1, limit=4
    $region2: #{tpu_custom_call.1} parent=1 // loop_pre_header
      _
    $region3: #{tpu_custom_call.1} parent=1 // loop_header
      %s16 = sphi 0, %s20
      %p17 = scmp.ge.s32.totalorder %s16, 4
      %s23 = sphi 0, %s35
      %s24 = sphi 0, %s31
      %s25 = sphi 0, %s23
      %s26 = sphi 0, %s24
      %s27 = sphi 0, %s25
      %s28 = sphi 0, %s26
      %s40 = sphi 0, %s42
      %s43 = sphi 0, %s40
      %s44 = sphi 0, %s43
      %s60 = sphi 0, %s44
      %s64 = sphi 0, %s64
      %s66 = sphi 0, %s64
      %s67 = sphi 0, %s66
      %s81 = sphi 0, %s67
      %s85 = sphi 0, %s85
      %s87 = sphi 0, %s85
      %s88 = sphi 0, %s87
      %s102 = sphi 0, %s88
      %s110 = sphi 0, %s112
      %s113 = sphi 0, %s110
      %s114 = sphi 0, %s113
      %s130 = sphi 0, %s114
    $region4: #{tpu_custom_call.1} parent=1 // loop_header_branch
      %19 = sbr.rel (%p17) target = $region8
    $region5: #{tpu_custom_call.1} parent=1 // loop_body
      %s21 = ssub.s32 %s16, 1
      %s22 = ssub.s32 %s16, 2
      %s29 = sadd.s32 1, %s24
      %p30 = scmp.ge.s32.totalorder %s29, 2
      %s31 = scalar_select %p30, 0, %s29
      %s32 = sadd.s32 1, %s23
      %s33 = scalar_select %p30, %s32, %s23
      %p34 = scmp.ge.s32.totalorder %s33, 1
      %s35 = scalar_select %p34, 0, %s33
      %s36 = ssub.s32 %s23, %s35
      %s37 = ssub.s32 %s24, %s31
      %s38 = sor.u32 %s36, %s37
      %p39 = scmp.eq.s32.totalorder %s38, 0
      %s41 = sadd.s32 %s40, 1
      %s42 = scalar_select %p39, %s40, %s41
      %p45 = pneg %p39
      %p46 = scmp.eq.s32.totalorder %s16, 1
      %p47 = por %p45, %p46
      %p48 = scmp.ne.s32.totalorder %s40, %s43
      %p49 = scmp.eq.s32.totalorder %s16, 0
      %p50 = por %p48, %p49
      %p51 = scmp.ne.s32.totalorder %s40, %s43
      %p52 = scmp.eq.s32.totalorder %s21, 1
      %p53 = por %p51, %p52
      %p54 = scmp.ne.s32.totalorder %s43, %s44
      %p55 = scmp.eq.s32.totalorder %s21, 0
      %p56 = por %p54, %p55
      %p57 = scmp.ne.s32.totalorder %s43, %s44
      %p58 = scmp.eq.s32.totalorder %s22, 1
      %p59 = por %p57, %p58
      %p61 = scmp.ne.s32.totalorder %s44, %s60
      %p62 = scmp.eq.s32.totalorder %s22, 0
      %p63 = por %p61, %p62
      %s65 = sadd.s32 %s64, 1
      %p68 = scmp.eq.s32.totalorder %s16, 1
      %p69 = scmp.ne.s32.totalorder %s64, %s66
      %p70 = scmp.eq.s32.totalorder %s16, 0
      %p71 = por %p69, %p70
      %p72 = scmp.ne.s32.totalorder %s64, %s66
      %p73 = scmp.eq.s32.totalorder %s21, 1
      %p74 = por %p72, %p73
      %p75 = scmp.ne.s32.totalorder %s66, %s67
      %p76 = scmp.eq.s32.totalorder %s21, 0
      %p77 = por %p75, %p76
      %p78 = scmp.ne.s32.totalorder %s66, %s67
      %p79 = scmp.eq.s32.totalorder %s22, 1
      %p80 = por %p78, %p79
      %p82 = scmp.ne.s32.totalorder %s67, %s81
      %p83 = scmp.eq.s32.totalorder %s22, 0
      %p84 = por %p82, %p83
      %s86 = sadd.s32 %s85, 1
      %p89 = scmp.eq.s32.totalorder %s16, 1
      %p90 = scmp.ne.s32.totalorder %s85, %s87
      %p91 = scmp.eq.s32.totalorder %s16, 0
      %p92 = por %p90, %p91
      %p93 = scmp.ne.s32.totalorder %s85, %s87
      %p94 = scmp.eq.s32.totalorder %s21, 1
      %p95 = por %p93, %p94
      %p96 = scmp.ne.s32.totalorder %s87, %s88
      %p97 = scmp.eq.s32.totalorder %s21, 0
      %p98 = por %p96, %p97
      %p99 = scmp.ne.s32.totalorder %s87, %s88
      %p100 = scmp.eq.s32.totalorder %s22, 1
      %p101 = por %p99, %p100
      %p103 = scmp.ne.s32.totalorder %s88, %s102
      %p104 = scmp.eq.s32.totalorder %s22, 0
      %p105 = por %p103, %p104
      %s106 = ssub.s32 %s23, %s35
      %s107 = ssub.s32 %s24, %s31
      %s108 = sor.u32 %s106, %s107
      %p109 = scmp.eq.s32.totalorder %s108, 0
      %s111 = sadd.s32 %s110, 1
      %s112 = scalar_select %p109, %s110, %s111
      %p115 = pneg %p109
      %p116 = scmp.eq.s32.totalorder %s16, 1
      %p117 = por %p115, %p116
      %p118 = scmp.ne.s32.totalorder %s110, %s113
      %p119 = scmp.eq.s32.totalorder %s16, 0
      %p120 = por %p118, %p119
      %p121 = scmp.ne.s32.totalorder %s110, %s113
      %p122 = scmp.eq.s32.totalorder %s21, 1
      %p123 = por %p121, %p122
      %p124 = scmp.ne.s32.totalorder %s113, %s114
      %p125 = scmp.eq.s32.totalorder %s21, 0
      %p126 = por %p124, %p125
      %p127 = scmp.ne.s32.totalorder %s113, %s114
      %p128 = scmp.eq.s32.totalorder %s22, 1
      %p129 = por %p127, %p128
      %p131 = scmp.ne.s32.totalorder %s114, %s130
      %p132 = scmp.eq.s32.totalorder %s22, 0
      %p133 = por %p131, %p132
      %p134 = scmp.le.s32.totalorder 1, %s16
      %p135 = scmp.lt.s32.totalorder %s16, 3
      %p136 = pnand %p134, %p135
      %p137 = pneg %p136
      // Predicated region
      $region9: #{tpu_custom_call.1} parent=5 // pred_check
        _
      $region10: #{tpu_custom_call.1} parent=5 // pred_check_branch
        %139 = sbr.rel (%p136) target = $region12
      $region11: #{tpu_custom_call.1} parent=5 // pred_region
        %s140 = ssub.s32 %s16, 1
        // Predicated region
        $region13: #{tpu_custom_call.1} parent=11 // pred_check
          %p141 = pneg %p77
        $region14: #{tpu_custom_call.1} parent=11 // pred_check_branch
          %143 = sbr.rel (%p141) target = $region16
        $region15: #{tpu_custom_call.1} parent=11 // pred_region
          _
        $region16: #{tpu_custom_call.1} parent=11 // pred_fallthru
          _
        // Predicated region
        $region17: #{tpu_custom_call.1} parent=11 // pred_check
          %p144 = pneg %p98
        $region18: #{tpu_custom_call.1} parent=11 // pred_check_branch
          %146 = sbr.rel (%p144) target = $region20
        $region19: #{tpu_custom_call.1} parent=11 // pred_region
          _
        $region20: #{tpu_custom_call.1} parent=11 // pred_fallthru
          _
      $region12: #{tpu_custom_call.1} parent=5 // pred_fallthru
        _
      %p147 = scmp.lt.s32.totalorder %s16, 2
      // Predicated region
      $region21: #{tpu_custom_call.1} parent=5 // pred_check
        %p148 = pneg %p147
      $region22: #{tpu_custom_call.1} parent=5 // pred_check_branch
        %150 = sbr.rel (%p148) target = $region24
      $region23: #{tpu_custom_call.1} parent=5 // pred_region
        // Predicated region
        $region25: #{tpu_custom_call.1} parent=23 // pred_check
          %p151 = pneg %p50
        $region26: #{tpu_custom_call.1} parent=23 // pred_check_branch
          %153 = sbr.rel (%p151) target = $region28
        $region27: #{tpu_custom_call.1} parent=23 // pred_region
          %s154 = sand.u32 %s40, 1
          %s155 = scalar_lea.sflag [#allocation4], %s154
          %s156 = sand.u32 %s40, 1
          %s157 = smul.addr %s156, 32
          %s158 = scalar_lea.vmem [#allocation3], %s157
          %s159 = smul.u32 2, %s23
          %s161 = ssub.s32 512, 512
          %162 = vsyncadd %s155, %s161
          %s163 = smul.addr %s159, 4
          %s164 = sadd.s32 %s24, %s163
          %s165 = smul.addr %s164, 128
          %s166 = scalar_lea.hbm %s0, %s165
          %s167 = sshll.u32 %s158, 4
          %s168 = int_to_ptr.vmem [resolvable:$true] %s167
          %173 = dma.hbm_to_vmem [thread:$0]  %s166, 512, %s168, %s155, 256, 128, 8
        $region28: #{tpu_custom_call.1} parent=23 // pred_fallthru
          _
      $region24: #{tpu_custom_call.1} parent=5 // pred_fallthru
        _
      %p174 = scmp.le.s32.totalorder 1, %s16
      %p175 = scmp.lt.s32.totalorder %s16, 3
      %p176 = pnand %p174, %p175
      %p177 = pneg %p176
      // Predicated region
      $region29: #{tpu_custom_call.1} parent=5 // pred_check
        _
      $region30: #{tpu_custom_call.1} parent=5 // pred_check_branch
        %179 = sbr.rel (%p176) target = $region32
      $region31: #{tpu_custom_call.1} parent=5 // pred_region
        %s180 = ssub.s32 %s16, 1
        %s181 = sand.u32 %s43, 1
        %s182 = scalar_lea.sflag [#allocation4], %s181
        %s183 = sand.u32 %s43, 1
        %s184 = smul.addr %s183, 32
        %s185 = scalar_lea.vmem [#allocation3], %s184
        // Predicated region
        $region33: #{tpu_custom_call.1} parent=31 // pred_check
          %p186 = pneg %p56
        $region34: #{tpu_custom_call.1} parent=31 // pred_check_branch
          %188 = sbr.rel (%p186) target = $region36
        $region35: #{tpu_custom_call.1} parent=31 // pred_region
          %189 = dma.done %s182, 512
        $region36: #{tpu_custom_call.1} parent=31 // pred_fallthru
          _
        %s190 = sand.u32 %s43, 1
        %s191 = scalar_lea.sflag [#allocation4], %s190
        %s192 = sand.u32 %s43, 1
        %s193 = smul.addr %s192, 32
        %s194 = scalar_lea.vmem [#allocation3], %s193
        %p195 = pneg %p56
        %p196 = pneg %p53
        %p197 = pneg %p77
        %p198 = pneg %p74
        %p199 = pneg %p98
        %p200 = pneg %p95
        %p201 = pneg %p126
        %p202 = pneg %p123
        %s203 = sand.u32 %s113, 1
        %s204 = scalar_lea.sflag [#allocation5], %s203
        %s205 = sand.u32 %s113, 1
        %s206 = smul.addr %s205, 2
        %s207 = scalar_lea.vmem [#allocation6], %s206
        %s208 = smul.u32 2, %s25
        %v209 = vld [vmem:[%s185] sm:$0xff]
        %v210 = vld [vmem:[%s185 + $0x8] sm:$0xff]
        %v211 = vld [vmem:[%s185 + $0x10] sm:$0xff]
        %v212 = vld [vmem:[%s185 + $0x18] sm:$0xff]
        %v213 = vld [vmem:[%s1] sm:$0xff]
        %v214 = vld [vmem:[%s1 + $0x8] sm:$0xff]
        %216 = vset.pattern.permute.xlu0 0
        %217 = vperm.xlu0 %216, %v213
        %v218 = vpop.permute.xlu0 %217
        %221 = vset.pattern.permute.xlu0 0
        %222 = vperm.xlu0 %221, %v214
        %v223 = vpop.permute.xlu0 %222
        %v225 = vmul.f32 %v209, %v218
        %v226 = vmul.f32 %v210, %v223
        %v227 = vmul.f32 %v211, %v218
        %v228 = vmul.f32 %v212, %v223
        %v229 = vadd.f32 %v225, %v226
        %v230 = vrot.slane %v229, 4
        %v231 = vadd.f32 %v229, %v230
        %v232 = vrot.slane %v231, 2
        %v233 = vadd.f32 %v231, %v232
        %v234 = vrot.slane %v233, 1
        %v235 = vadd.f32 %v233, %v234
        %v236 = vadd.f32 %v227, %v228
        %v237 = vrot.slane %v236, 4
        %v238 = vadd.f32 %v236, %v237
        %v239 = vrot.slane %v238, 2
        %v240 = vadd.f32 %v238, %v239
        %v241 = vrot.slane %v240, 1
        %v242 = vadd.f32 %v240, %v241
        %s243 = sld [smem:[#allocation2]]
        %v244 = vstv %s243
        %v245 = vadd.f32 %v235, %v244
        %v246 = vadd.f32 %v242, %v244
        %v247 = vxor.u32 %v245, 2147483648
        %v248 = vxor.u32 %v246, 2147483648
        %v249 = vmul.f32 %v247, 1.442695
        %v250 = vpow.pop %v249
        %v251 = vmul.f32 %v248, 1.442695
        %v252 = vpow.pop %v251
        %v253 = vadd.f32 %v250, 1.0
        %v254 = vadd.f32 %v252, 1.0
        %v255 = vrcp.pop %v253
        %v256 = vmul.f32 1.0, %v255
        %v257 = vrcp.pop %v254
        %v258 = vmul.f32 1.0, %v257
        %vm261 = vcmask 1041409
        %v262 = vsel %vm261, %v258, %v256
        %264 = vst [vmem:[%s207] sm:$0x3] %v262
        %s265 = sand.u32 %s113, 1
        %s266 = scalar_lea.sflag [#allocation5], %s265
        %s267 = sand.u32 %s113, 1
        %s268 = smul.addr %s267, 2
        %s269 = scalar_lea.vmem [#allocation6], %s268
        // Predicated region
        $region37: #{tpu_custom_call.1} parent=31 // pred_check
          %p270 = pneg %p123
        $region38: #{tpu_custom_call.1} parent=31 // pred_check_branch
          %272 = sbr.rel (%p270) target = $region40
        $region39: #{tpu_custom_call.1} parent=31 // pred_region
          %s274 = ssub.s32 32, 32
          %275 = vsyncadd %s266, %s274
          %s276 = smul.addr %s25, 2
          %s277 = sadd.s32 %s26, %s276
          %s278 = smul.addr %s277, 32
          %s279 = scalar_lea.hbm %s3, %s278
          %s281 = sshll.u32 %s269, 4
          %s282 = int_to_ptr.vmem [resolvable:$true] %s281
          %284 = dma.vmem_to_hbm [thread:$0]  %s282, 32, %s279, %s266
        $region40: #{tpu_custom_call.1} parent=31 // pred_fallthru
          _
      $region32: #{tpu_custom_call.1} parent=5 // pred_fallthru
        _
      %p285 = scmp.le.s32.totalorder 2, %s16
      // Predicated region
      $region41: #{tpu_custom_call.1} parent=5 // pred_check
        %p286 = pneg %p285
      $region42: #{tpu_custom_call.1} parent=5 // pred_check_branch
        %288 = sbr.rel (%p286) target = $region44
      $region43: #{tpu_custom_call.1} parent=5 // pred_region
        %s289 = ssub.s32 %s16, 2
        // Predicated region
        $region45: #{tpu_custom_call.1} parent=43 // pred_check
          %p290 = pneg %p129
        $region46: #{tpu_custom_call.1} parent=43 // pred_check_branch
          %292 = sbr.rel (%p290) target = $region48
        $region47: #{tpu_custom_call.1} parent=43 // pred_region
          %s293 = sand.u32 %s114, 1
          %s294 = scalar_lea.sflag [#allocation5], %s293
          %s295 = sand.u32 %s114, 1
          %s296 = smul.addr %s295, 2
          %s297 = scalar_lea.vmem [#allocation6], %s296
          %298 = dma.done %s294, 32
        $region48: #{tpu_custom_call.1} parent=43 // pred_fallthru
          _
      $region44: #{tpu_custom_call.1} parent=5 // pred_fallthru
        _
    $region6: #{tpu_custom_call.1} parent=1 // loop_footer
      %s20 = sadd.s32 1, %s16
    $region7: #{tpu_custom_call.1} parent=1 // loop_footer_branch
      %15 = sbr.rel target = $region3
    $region8: #{tpu_custom_call.1} parent=1 // loop_exit
      _
    %299 = vsyncpa [#allocation4], 1
    %s300 = scalar_lea.sflag [#allocation4], 1
    %301 = vsyncpa %s300, 1
    %302 = vsyncpa [#allocation5], 1
    %s303 = scalar_lea.sflag [#allocation5], 1
    %304 = vsyncpa %s303, 1

</llo_original>
